<compile_context>
chip_gen: v7x
topology: tpu7x:2x2x1
jax: 0.10.0
libtpu: 0.0.40
codegen_flags: <defaults>
</compile_context>

<pallas_src>
import jax
import jax.numpy as jnp
from jax.experimental import pallas as pl
from jax.experimental.pallas import tpu as pltpu


def _relu_kernel(x_ref, o_ref):
    # Elementwise max against a scalar zero (VPU), no zero tile materialized.
    x = x_ref[...]
    o_ref[...] = jnp.maximum(x, jnp.zeros((), x.dtype))


def _round_up(v: int, m: int) -> int:
    return ((v + m - 1) // m) * m


def _sublane(itemsize: int) -> int:
    # Packed sublane multiple: 8 for 4-byte, 16 for 2-byte, 32 for 1-byte.
    return max(8, 32 // max(itemsize, 1))


def _pick_lanes(n: int, sublane: int):
    """Widest lane-dense last dim that divides n AND leaves >= sublane rows."""
    for cand in (4096, 2048, 1024, 512, 256, 128):
        if n % cand == 0 and n // cand >= sublane:
            return cand
    return None


def _device_kind() -> str:
    try:
        return jax.devices()[0].device_kind.lower()
    except Exception:  # pragma: no cover - best-effort detection only
        return ""


def relu_pallas(
    x: jax.Array,
    *,
    min_pallas_bytes: int = 256 * 1024,
    target_block_bytes: int | None = None,
    vmem_limit_bytes: int | None = None,
    donate: bool = False,
) -> jax.Array:
    """ReLU(x) = max(x, 0) for any shape, computed in a Pallas TPU kernel."""
    orig_shape = x.shape
    dtype = x.dtype
    n = x.size
    if n == 0:
        return x

    itemsize = jnp.dtype(dtype).itemsize
    zero = jnp.zeros((), dtype)

    # Small-size escape hatch: let XLA fuse the max into whatever produced x.
    if n * itemsize < min_pallas_bytes or x.ndim == 0:
        return jnp.maximum(x, zero)

    # Generation-aware defaults.
    kind = _device_kind()
    is_v7 = "v7" in kind
    num_tc = 2 if is_v7 else 1  # v5e / v6e: 1 TensorCore; the grid is serial.
    if target_block_bytes is None:
        target_block_bytes = (8 if is_v7 else 4) * 1024 * 1024
    if vmem_limit_bytes is None:
        vmem_limit_bytes = (48 if is_v7 else 32) * 1024 * 1024

    sublane = _sublane(itemsize)

    # ---- Choose a 2-D slab (rows, lanes) that needs NO extra HBM passes. ----
    lanes = _pick_lanes(n, sublane)
    if lanes is not None:
        # Fast path: flatten to a lane-dense slab (lanes a multiple of 128,
        # rows >= sublane).  Pure metadata reshape, no data movement.
        x2d = x.reshape(n // lanes, lanes)
    else:
        # Ragged path: keep the natural last dim as a FULL-EXTENT lane dim and
        # tile only over the collapsed leading dims.  No pad, no slice, no
        # concat -> one read + one write.  (Last grid block may be ragged in
        # rows; OOB writes are dropped, which is safe for elementwise ReLU.)
        if x.ndim < 2:
            x2d = x.reshape(1, n)
        else:
            x2d = x.reshape(-1, orig_shape[-1])

    rows, lanes = x2d.shape
    bytes_per_row = lanes * itemsize

    # Guard against pathological un-tileable last dims (would blow VMEM).
    if rows == 0 or sublane * bytes_per_row > 8 * 1024 * 1024:
        return jnp.maximum(x, zero)

    # ---- Block sizing (dtype-aware sublane rounding). ----
    target_rows = max(
        sublane, (target_block_bytes // bytes_per_row) // sublane * sublane
    )
    # Either a sublane-multiple tile or the full row extent (both satisfy the
    # (sublane,128)-or-full-extent tiling rule).
    tile_rows = rows if target_rows >= rows else target_rows

    grid_rows = pl.cdiv(rows, tile_rows)
    # v7x megacore only: prefer an even number of near-equal blocks so both
    # TensorCores get balanced work.  On 1-TC chips the grid is a serial loop,
    # so splitting would only add per-step overhead.
    if num_tc == 2 and rows >= 2 * sublane and grid_rows <= 8 and grid_rows % 2 == 1:
        tile_rows = max(sublane, _round_up(pl.cdiv(rows, grid_rows + 1), sublane))
        grid_rows = pl.cdiv(rows, tile_rows)

    extra = {}
    if donate:
        # Opt-in aliasing for callers that donate x: halves peak HBM footprint.
        extra["input_output_aliases"] = {0: 0}

    out2d = pl.pallas_call(
        _relu_kernel,
        out_shape=jax.ShapeDtypeStruct((rows, lanes), dtype),
        grid_spec=pltpu.PrefetchScalarGridSpec(
            num_scalar_prefetch=0,
            grid=(grid_rows,),
            in_specs=[pl.BlockSpec((tile_rows, lanes), lambda i: (i, 0))],
            out_specs=pl.BlockSpec((tile_rows, lanes), lambda i: (i, 0)),
        ),
        compiler_params=pltpu.CompilerParams(
            dimension_semantics=("parallel",),
            vmem_limit_bytes=vmem_limit_bytes,
        ),
        cost_estimate=pl.CostEstimate(
            flops=n, transcendentals=0, bytes_accessed=2 * n * itemsize
        ),
        **extra,
    )(x2d)

    return out2d.reshape(orig_shape)


if __name__ == "__main__":
    key = jax.random.PRNGKey(0)

    # Spec-consistent small NCHW activation; force the Pallas path (the
    # default escape hatch would hand such a tiny tensor to XLA).
    x = jax.random.normal(key, (2, 4, 16, 16), dtype=jnp.float32)
    y = relu_pallas(x, min_pallas_bytes=0)
    jax.block_until_ready(y)
    assert y.shape == x.shape and y.dtype == x.dtype
    assert jnp.array_equal(y, jnp.maximum(x, 0.0))

    # bf16: exercises dtype-aware (16,128) sublane tiling.
    xb = jax.random.normal(jax.random.PRNGKey(1), (4, 16, 32), dtype=jnp.bfloat16)
    yb = relu_pallas(xb, min_pallas_bytes=0)
    jax.block_until_ready(yb)
    assert jnp.array_equal(yb, jnp.maximum(xb, jnp.zeros((), xb.dtype)))

    # Ragged size (1089 elements, not a multiple of 128): full-extent lane dim,
    # no pad / slice / concat passes.
    xr = jax.random.normal(jax.random.PRNGKey(2), (33, 33), dtype=jnp.float32)
    yr = relu_pallas(xr, min_pallas_bytes=0)
    jax.block_until_ready(yr)
    assert jnp.array_equal(yr, jnp.maximum(xr, 0.0))

    # Medium tensor (512 KiB) goes through the kernel via the default path.
    xm = jax.random.normal(jax.random.PRNGKey(3), (256, 512), dtype=jnp.float32)
    ym = relu_pallas(xm)
    jax.block_until_ready(ym)
    assert jnp.array_equal(ym, jnp.maximum(xm, 0.0))

    # Default small-size escape hatch (no kernel launch) stays correct.
    ys = relu_pallas(x)
    jax.block_until_ready(ys)
    assert jnp.array_equal(ys, jnp.maximum(x, 0.0))

    print("KERNEL_OK")
</pallas_src>

<mosaic_0001>
module attributes {stable_mosaic.version = 11 : i64} {
  func.func @_relu_kernel(%arg0: i32, %arg1: memref<8x256xf32, #tpu.memory_space<vmem>>, %arg2: memref<8x256xf32, #tpu.memory_space<vmem>>) attributes {dimension_semantics = [#tpu.dimension_semantics<parallel>], iteration_bounds = array<i64: 1>, scalar_prefetch = 0 : i64, scratch_operands = 0 : i64, tpu.core_type = #tpu.core_type<tc>, window_params = [{transform_indices = @transform_0, window_bounds = array<i64: 8, 256>}, {transform_indices = @transform_1, window_bounds = array<i64: 8, 256>}]} {
    %c0 = arith.constant 0 : index
    %c0_0 = arith.constant 0 : index
    %0 = vector.load %arg1[%c0, %c0_0] : memref<8x256xf32, #tpu.memory_space<vmem>>, vector<8x256xf32>
    %cst = arith.constant 0.000000e+00 : f32
    %1 = vector.broadcast %cst : f32 to vector<8x256xf32>
    %2 = arith.maximumf %0, %1 : vector<8x256xf32>
    %c0_1 = arith.constant 0 : index
    %c0_2 = arith.constant 0 : index
    %3 = vector.load %arg2[%c0_1, %c0_2] : memref<8x256xf32, #tpu.memory_space<vmem>>, vector<8x256xf32>
    tpu.vector_store %arg2[%c0_1, %c0_2], %2 {strides = array<i32>} : memref<8x256xf32, #tpu.memory_space<vmem>>, vector<8x256xf32>,
    return
  }
  func.func @transform_0(%arg0: i32) -> (i32, i32) {
    %c0_i32 = arith.constant 0 : i32
    %c0_i32_0 = arith.constant 0 : i32
    return %arg0, %c0_i32 : i32, i32
  }
  func.func @transform_1(%arg0: i32) -> (i32, i32) {
    %c0_i32 = arith.constant 0 : i32
    %c0_i32_0 = arith.constant 0 : i32
    return %arg0, %c0_i32 : i32, i32
  }
}

</mosaic_0001>

<llo_original>
// kernel: tpu_custom_call.1
$region0: #{tpu_custom_call.1}
  #allocation0 [shape = 'u32[]', space=smem, size = 0x4, offset = 0x4, fixed_abs, tag = 'smem constant byte address 0x4 - core index']
  #allocation1 [shape = 'u32[144,128]{1,0:T(1,128)}', space=vmem, size = 0x12000, scoped, tag = 'internal scratch']
  %s0 = inlined_call_operand.hbm [shape: f32[8,256], index: 0, kind: input, shape index: {}]
  %s1 = inlined_call_operand.hbm [shape: f32[8,256], index: 1, kind: output, shape index: {}]
  %s2 = sld [smem:[#allocation0]]
  $region18: #{tpu_custom_call.1} parent=0
    _
  %s4 = ssub.s32 1, %s2
  %s5 = scalar_select 0, %s4, %s2
  $region1: #{tpu_custom_call.1} parent=0
    #allocation2 [shape = 'u8[8192]{0}', space=vmem, size = 0x2000, scoped, tag = 'input window, operand 0, single buffered']
    #allocation3 [shape = 's32[1]{0}', space=sflag, size = 0x4, scoped, tag = 'scoped memory for tpu_custom_call.1']
    #allocation4 [shape = 's32[1]{0}', space=sflag, size = 0x4, scoped, tag = 'scoped memory for tpu_custom_call.1']
    #allocation5 [shape = 'u8[8192]{0}', space=vmem, size = 0x2000, scoped, tag = 'output window, operand 0, single buffered']
    %6 = vsyncpa [#allocation3], 0
    %7 = vsyncpa [#allocation4], 0
    // Predicated region
    $region2: #{tpu_custom_call.1} parent=1 // pred_check
      _
    $region3: #{tpu_custom_call.1} parent=1 // pred_check_branch
      %9 = sbr.rel (0) target = $region5
    $region4: #{tpu_custom_call.1} parent=1 // pred_region
      %s11 = ssub.s32 256, 256
      %12 = vsyncadd [#allocation3], %s11
      %s14 = sshll.u32 [#allocation2], 4
      %s15 = int_to_ptr.vmem [resolvable:$true] %s14
      %17 = dma.hbm_to_vmem [thread:$0]  %s0, 256, %s15, [#allocation3]
    $region5: #{tpu_custom_call.1} parent=1 // pred_fallthru
      _
    // Predicated region
    $region6: #{tpu_custom_call.1} parent=1 // pred_check
      _
    $region7: #{tpu_custom_call.1} parent=1 // pred_check_branch
      %19 = sbr.rel (0) target = $region9
    $region8: #{tpu_custom_call.1} parent=1 // pred_region
      %20 = dma.done [#allocation3], 256
    $region9: #{tpu_custom_call.1} parent=1 // pred_fallthru
      _
    %v21 = vld [vmem:[#allocation2] sm:$0xff]
    %v22 = vld [vmem:[#allocation2 + $0x8] sm:$0xff]
    %v23 = vmax.f32 %v21, 0.0
    %v24 = vmax.f32 %v22, 0.0
    %25 = vst [vmem:[#allocation5] sm:$0xff] %v23
    %26 = vst [vmem:[#allocation5 + $0x8] sm:$0xff] %v24
    // Predicated region
    $region10: #{tpu_custom_call.1} parent=1 // pred_check
      _
    $region11: #{tpu_custom_call.1} parent=1 // pred_check_branch
      %28 = sbr.rel (0) target = $region13
    $region12: #{tpu_custom_call.1} parent=1 // pred_region
      %s30 = ssub.s32 256, 256
      %31 = vsyncadd [#allocation4], %s30
      %s33 = sshll.u32 [#allocation5], 4
      %s34 = int_to_ptr.vmem [resolvable:$true] %s33
      %36 = dma.vmem_to_hbm [thread:$0]  %s34, 256, %s1, [#allocation4]
    $region13: #{tpu_custom_call.1} parent=1 // pred_fallthru
      _
    // Predicated region
    $region14: #{tpu_custom_call.1} parent=1 // pred_check
      _
    $region15: #{tpu_custom_call.1} parent=1 // pred_check_branch
      %38 = sbr.rel (0) target = $region17
    $region16: #{tpu_custom_call.1} parent=1 // pred_region
      %39 = dma.done [#allocation4], 256
    $region17: #{tpu_custom_call.1} parent=1 // pred_fallthru
      _
    %40 = vsyncpa [#allocation3], 1
    %41 = vsyncpa [#allocation4], 1

</llo_original>
